<compile_context>
chip_gen: v7x
topology: tpu7x:2x2x1
jax: 0.10.0
libtpu: 0.0.40
codegen_flags: <defaults>
</compile_context>

<pallas_src>
import math

import jax
import jax.numpy as jnp
from jax.experimental import pallas as pl
from jax.experimental.pallas import tpu as pltpu


def _reshape_copy_kernel(x_ref, o_ref):
    # Pure data movement: one lane-dense (row_tile, 128) tile per grid step.
    o_ref[...] = x_ref[...]


def _resolve_out_shape(out_shape, n):
    out_shape = tuple(int(s) for s in out_shape)
    if -1 in out_shape:
        known = 1
        for s in out_shape:
            if s != -1:
                known *= s
        out_shape = tuple(n // known if s == -1 else s for s in out_shape)
    assert math.prod(out_shape) == n, "out_shape incompatible with input size"
    return out_shape


def pallas_reshape(x, out_shape):
    """Reshape `x` to `out_shape` via a lane-dense tiled Pallas copy."""
    n = x.size
    out_shape = _resolve_out_shape(out_shape, n)
    if n == 0:
        return jnp.reshape(x, out_shape)

    LANE = 128
    itemsize = jnp.dtype(x.dtype).itemsize
    sub = 8 * max(1, 4 // itemsize)          # 8 for f32, 16 for bf16, 32 for i8

    rows = pl.cdiv(n, LANE)
    # Row tile: multiple of the sublane packing, capped at 512 rows
    # (512x128xf32 = 256 KiB/block; x2 operands x2 double-buffers ~= 1 MiB VMEM).
    row_tile = min(512, pl.cdiv(rows, sub) * sub)
    rows_pad = pl.cdiv(rows, row_tile) * row_tile
    n_pad = rows_pad * LANE

    flat = jnp.reshape(x, (-1,))             # metadata only (contiguous)
    if n_pad != n:
        flat = jnp.pad(flat, (0, n_pad - n))
    x2d = jnp.reshape(flat, (rows_pad, LANE))

    grid = (rows_pad // row_tile,)
    out2d = pl.pallas_call(
        _reshape_copy_kernel,
        out_shape=jax.ShapeDtypeStruct((rows_pad, LANE), x.dtype),
        grid=grid,
        in_specs=[pl.BlockSpec((row_tile, LANE), lambda i: (i, 0))],
        out_specs=pl.BlockSpec((row_tile, LANE), lambda i: (i, 0)),
        compiler_params=pltpu.CompilerParams(
            dimension_semantics=("parallel",)),
    )(x2d)

    return jnp.reshape(jnp.reshape(out2d, (-1,))[:n], out_shape)


if __name__ == "__main__":
    key = jax.random.PRNGKey(0)
    k1, k2 = jax.random.split(key)

    # Case 1: small shape implied by the module (batch=2, channels=4, 16x16).
    in_shape1, out_shape1 = (2, 4, 16, 16), (2, 4, 256)
    x1 = jax.random.normal(k1, in_shape1, dtype=jnp.float32)
    y1 = jax.block_until_ready(pallas_reshape(x1, out_shape1))
    ref1 = jnp.reshape(x1, out_shape1)
    assert y1.shape == out_shape1
    assert bool(jnp.array_equal(y1, ref1)), "mismatch vs reference (case 1)"

    # Case 2: size not a multiple of 128 and large enough for a multi-step
    # pipelined grid (exercises padding + tiling + -1 inference).
    in_shape2, out_shape2 = (2, 6, 100, 100), (12, -1)
    x2 = jax.random.normal(k2, in_shape2, dtype=jnp.float32)
    y2 = jax.block_until_ready(pallas_reshape(x2, out_shape2))
    ref2 = jnp.reshape(x2, (12, 10000))
    assert y2.shape == (12, 10000)
    assert bool(jnp.array_equal(y2, ref2)), "mismatch vs reference (case 2)"

    print("KERNEL_OK")
</pallas_src>

<mosaic_0001>
module attributes {stable_mosaic.version = 11 : i64} {
  func.func @_reshape_copy_kernel(%arg0: i32, %arg1: memref<16x128xf32, #tpu.memory_space<vmem>>, %arg2: memref<16x128xf32, #tpu.memory_space<vmem>>) attributes {dimension_semantics = [#tpu.dimension_semantics<parallel>], iteration_bounds = array<i64: 1>, scalar_prefetch = 0 : i64, scratch_operands = 0 : i64, tpu.core_type = #tpu.core_type<tc>, window_params = [{transform_indices = @transform_0, window_bounds = array<i64: 16, 128>}, {transform_indices = @transform_1, window_bounds = array<i64: 16, 128>}]} {
    %c0 = arith.constant 0 : index
    %c0_0 = arith.constant 0 : index
    %0 = vector.load %arg1[%c0, %c0_0] : memref<16x128xf32, #tpu.memory_space<vmem>>, vector<16x128xf32>
    %c0_1 = arith.constant 0 : index
    %c0_2 = arith.constant 0 : index
    %1 = vector.load %arg2[%c0_1, %c0_2] : memref<16x128xf32, #tpu.memory_space<vmem>>, vector<16x128xf32>
    tpu.vector_store %arg2[%c0_1, %c0_2], %0 {strides = array<i32>} : memref<16x128xf32, #tpu.memory_space<vmem>>, vector<16x128xf32>,
    return
  }
  func.func @transform_0(%arg0: i32) -> (i32, i32) {
    %c0_i32 = arith.constant 0 : i32
    %c0_i32_0 = arith.constant 0 : i32
    return %arg0, %c0_i32 : i32, i32
  }
  func.func @transform_1(%arg0: i32) -> (i32, i32) {
    %c0_i32 = arith.constant 0 : i32
    %c0_i32_0 = arith.constant 0 : i32
    return %arg0, %c0_i32 : i32, i32
  }
}

</mosaic_0001>

<llo_original>
// kernel: tpu_custom_call.1
$region0: #{tpu_custom_call.1}
  #allocation0 [shape = 'u32[]', space=smem, size = 0x4, offset = 0x4, fixed_abs, tag = 'smem constant byte address 0x4 - core index']
  #allocation1 [shape = 'u32[144,128]{1,0:T(1,128)}', space=vmem, size = 0x12000, scoped, tag = 'internal scratch']
  %s0 = inlined_call_operand.hbm [shape: f32[16,128], index: 0, kind: input, shape index: {}]
  %s1 = inlined_call_operand.hbm [shape: f32[16,128], index: 1, kind: output, shape index: {}]
  %s2 = sld [smem:[#allocation0]]
  $region18: #{tpu_custom_call.1} parent=0
    _
  %s4 = ssub.s32 1, %s2
  %s5 = scalar_select 0, %s4, %s2
  $region1: #{tpu_custom_call.1} parent=0
    #allocation2 [shape = 'u8[8192]{0}', space=vmem, size = 0x2000, scoped, tag = 'input window, operand 0, single buffered']
    #allocation3 [shape = 's32[1]{0}', space=sflag, size = 0x4, scoped, tag = 'scoped memory for tpu_custom_call.1']
    #allocation4 [shape = 's32[1]{0}', space=sflag, size = 0x4, scoped, tag = 'scoped memory for tpu_custom_call.1']
    #allocation5 [shape = 'u8[8192]{0}', space=vmem, size = 0x2000, scoped, tag = 'output window, operand 0, single buffered']
    %6 = vsyncpa [#allocation3], 0
    %7 = vsyncpa [#allocation4], 0
    // Predicated region
    $region2: #{tpu_custom_call.1} parent=1 // pred_check
      _
    $region3: #{tpu_custom_call.1} parent=1 // pred_check_branch
      %9 = sbr.rel (0) target = $region5
    $region4: #{tpu_custom_call.1} parent=1 // pred_region
      %s11 = ssub.s32 256, 256
      %12 = vsyncadd [#allocation3], %s11
      %s13 = sshll.u32 [#allocation2], 4
      %s14 = int_to_ptr.vmem [resolvable:$true] %s13
      %19 = dma.hbm_to_vmem [thread:$0]  %s0, 256, %s14, [#allocation3], 128, 128, 8
    $region5: #{tpu_custom_call.1} parent=1 // pred_fallthru
      _
    // Predicated region
    $region6: #{tpu_custom_call.1} parent=1 // pred_check
      _
    $region7: #{tpu_custom_call.1} parent=1 // pred_check_branch
      %21 = sbr.rel (0) target = $region9
    $region8: #{tpu_custom_call.1} parent=1 // pred_region
      %22 = dma.done [#allocation3], 256
    $region9: #{tpu_custom_call.1} parent=1 // pred_fallthru
      _
    %v23 = vld [vmem:[#allocation2] sm:$0xff]
    %v24 = vld [vmem:[#allocation2 + $0x8] sm:$0xff]
    %25 = vst [vmem:[#allocation5] sm:$0xff] %v23
    %26 = vst [vmem:[#allocation5 + $0x8] sm:$0xff] %v24
    // Predicated region
    $region10: #{tpu_custom_call.1} parent=1 // pred_check
      _
    $region11: #{tpu_custom_call.1} parent=1 // pred_check_branch
      %28 = sbr.rel (0) target = $region13
    $region12: #{tpu_custom_call.1} parent=1 // pred_region
      %s30 = ssub.s32 256, 256
      %31 = vsyncadd [#allocation4], %s30
      %s32 = sshll.u32 [#allocation5], 4
      %s33 = int_to_ptr.vmem [resolvable:$true] %s32
      %38 = dma.vmem_to_hbm [thread:$0]  %s33, 256, %s1, [#allocation4], 128, 128, 8
    $region13: #{tpu_custom_call.1} parent=1 // pred_fallthru
      _
    // Predicated region
    $region14: #{tpu_custom_call.1} parent=1 // pred_check
      _
    $region15: #{tpu_custom_call.1} parent=1 // pred_check_branch
      %40 = sbr.rel (0) target = $region17
    $region16: #{tpu_custom_call.1} parent=1 // pred_region
      %41 = dma.done [#allocation4], 256
    $region17: #{tpu_custom_call.1} parent=1 // pred_fallthru
      _
    %42 = vsyncpa [#allocation3], 1
    %43 = vsyncpa [#allocation4], 1

</llo_original>
